<compile_context>
chip_gen: v5e
topology: v5e:2x2
jax: 0.10.0
libtpu: 0.0.40
codegen_flags: <defaults>
</compile_context>

<pallas_src>
import math
import functools

import jax
import jax.numpy as jnp
from jax import lax
from jax.experimental import pallas as pl
from jax.experimental.pallas import tpu as pltpu


# ----------------------------------------------------------------------------
# Buffers / parameters (deterministic; mirrors nn.Module.__init__ layouts)
# ----------------------------------------------------------------------------
def make_pos_encoding(dim_model: int, max_len: int) -> jnp.ndarray:
    positions = jnp.arange(0, max_len, dtype=jnp.float32)[:, None]          # (max_len, 1)
    division_term = jnp.exp(
        jnp.arange(0, dim_model, 2, dtype=jnp.float32)
        * (-math.log(10000.0) / dim_model)
    )
    pe = jnp.zeros((max_len, dim_model), dtype=jnp.float32)
    pe = pe.at[:, 0::2].set(jnp.sin(positions * division_term))
    pe = pe.at[:, 1::2].set(jnp.cos(positions * division_term))
    return pe                                                               # (max_len, D)


def init_params(key, num_tokens, d_model, num_heads, dim_ff, num_layers, max_len):
    """PyTorch-layout parameters (weight = (out_features, in_features))."""
    state = {"key": key}

    def nxt():
        state["key"], sub = jax.random.split(state["key"])
        return sub

    def mat(out_f, in_f):
        return jax.random.normal(nxt(), (out_f, in_f), jnp.float32) / math.sqrt(in_f)

    def vec(n, scale=0.05):
        return scale * jax.random.normal(nxt(), (n,), jnp.float32)

    params = dict(
        embedding=jax.random.normal(nxt(), (num_tokens, d_model), jnp.float32)
        / math.sqrt(d_model),
        pos_encoding=make_pos_encoding(d_model, max_len),
        layers=[],
        dec_w1=mat(d_model, d_model), dec_b1=vec(d_model),
        dec_w2=mat(num_tokens, d_model), dec_b2=vec(num_tokens),
    )
    for _ in range(num_layers):
        params["layers"].append(dict(
            wq=mat(d_model, d_model), bq=vec(d_model),
            wk=mat(d_model, d_model), bk=vec(d_model),
            wv=mat(d_model, d_model), bv=vec(d_model),
            wo=mat(d_model, d_model), bo=vec(d_model),
            ln1_g=1.0 + vec(d_model), ln1_b=vec(d_model),
            w1=mat(dim_ff, d_model), b1=vec(dim_ff),
            w2=mat(d_model, dim_ff), b2=vec(d_model),
            ln2_g=1.0 + vec(d_model), ln2_b=vec(d_model),
        ))
    return params


def pack_params(p, num_heads):
    """Re-layout PyTorch-style weights for the kernels (pre-transposed, per-head
    split, biases as (1, n)) so no transposes are needed inside the kernels."""
    def pack_layer(lp):
        D = lp["wq"].shape[0]
        H = num_heads
        hd = D // H

        def split_proj(w, b):
            wT = w.T                                            # (D_in, D_out)
            return (wT.reshape(D, H, hd).transpose(1, 0, 2),    # (H, D, hd)
                    b.reshape(H, 1, hd))                        # (H, 1, hd)

        wq, bq = split_proj(lp["wq"], lp["bq"])
        wk, bk = split_proj(lp["wk"], lp["bk"])
        wv, bv = split_proj(lp["wv"], lp["bv"])
        wo = lp["wo"].T.reshape(H, hd, D)                       # (H, hd, D)
        return dict(
            wq=wq, bq=bq, wk=wk, bk=bk, wv=wv, bv=bv,
            wo=wo, bo=lp["bo"].reshape(1, D),
            ln1_g=lp["ln1_g"].reshape(1, D), ln1_b=lp["ln1_b"].reshape(1, D),
            w1=lp["w1"].T, b1=lp["b1"].reshape(1, -1),
            w2=lp["w2"].T, b2=lp["b2"].reshape(1, -1),
            ln2_g=lp["ln2_g"].reshape(1, D), ln2_b=lp["ln2_b"].reshape(1, D),
        )

    return dict(
        embedding=p["embedding"],
        pos_encoding=p["pos_encoding"],
        layers=[pack_layer(lp) for lp in p["layers"]],
        dec_w1=p["dec_w1"].T, dec_b1=p["dec_b1"].reshape(1, -1),
        dec_w2=p["dec_w2"].T, dec_b2=p["dec_b2"].reshape(1, -1),
    )


# ----------------------------------------------------------------------------
# Pallas kernels
# ----------------------------------------------------------------------------
def _layernorm(x, g, b, eps=1e-5):
    mu = jnp.mean(x, axis=-1, keepdims=True)
    xc = x - mu
    var = jnp.mean(xc * xc, axis=-1, keepdims=True)
    return xc / jnp.sqrt(var + eps) * g + b


def _embed_pe_kernel(ids_ref, table_ref, pe_ref, o_ref, *, scale):
    """out = embedding[ids] * sqrt(D) + pos_encoding[:B] (broadcast over seq)."""
    B, S = ids_ref.shape
    V, D = table_ref.shape
    ids = ids_ref[...]
    iota = lax.broadcasted_iota(jnp.int32, (B, S, V), 2)
    onehot = (ids[:, :, None] == iota).astype(jnp.float32)        # (B, S, V)
    emb2 = jnp.dot(onehot.reshape(B * S, V), table_ref[...],
                   preferred_element_type=jnp.float32)            # (B*S, D)
    emb3 = emb2.reshape(B, S, D) * scale
    pe = pe_ref[0:B, :]                                           # PE resident, sliced once
    o_ref[...] = emb3 + pe[:, None, :]


def _embed_pe_dropout_kernel(seed_ref, ids_ref, table_ref, pe_ref, o_ref,
                             *, scale, keep_threshold, inv_keep):
    """Training path: same as above + dropout via a single seed and an unsigned
    integer threshold compare (no float-uniform construction, no sign-extension)."""
    B, S = ids_ref.shape
    V, D = table_ref.shape
    ids = ids_ref[...]
    iota = lax.broadcasted_iota(jnp.int32, (B, S, V), 2)
    onehot = (ids[:, :, None] == iota).astype(jnp.float32)
    emb2 = jnp.dot(onehot.reshape(B * S, V), table_ref[...],
                   preferred_element_type=jnp.float32)
    y = emb2.reshape(B, S, D) * scale + pe_ref[0:B, :][:, None, :]
    pltpu.prng_seed(seed_ref[0])                                  # seeded exactly once
    bits = pltpu.bitcast(pltpu.prng_random_bits(y.shape), jnp.uint32)
    keep = bits >= jnp.uint32(keep_threshold)                     # P(keep) = 1 - p
    o_ref[...] = jnp.where(keep, y * inv_keep, 0.0).astype(o_ref.dtype)


def _encoder_layer_kernel(x_ref, wq_ref, bq_ref, wk_ref, bk_ref, wv_ref, bv_ref,
                          wo_ref, bo_ref, g1_ref, be1_ref,
                          w1_ref, b1_ref, w2_ref, b2_ref, g2_ref, be2_ref,
                          o_ref):
    """One nn.TransformerEncoderLayer (batch_first, post-norm, ReLU, eval mode)."""
    B, S, D = x_ref.shape
    H, _, hd = wq_ref.shape
    x2 = x_ref[...].reshape(B * S, D)

    inv_sqrt_hd = 1.0 / math.sqrt(hd)
    attn2 = jnp.zeros((B * S, D), jnp.float32) + bo_ref[...]
    for h in range(H):                                            # static, small
        qh = (jnp.dot(x2, wq_ref[h], preferred_element_type=jnp.float32)
              + bq_ref[h]).reshape(B, S, hd)
        kh = (jnp.dot(x2, wk_ref[h], preferred_element_type=jnp.float32)
              + bk_ref[h]).reshape(B, S, hd)
        vh = (jnp.dot(x2, wv_ref[h], preferred_element_type=jnp.float32)
              + bv_ref[h]).reshape(B, S, hd)
        s = jnp.einsum('bqd,bkd->bqk', qh, kh,
                       preferred_element_type=jnp.float32) * inv_sqrt_hd
        s = s - jnp.max(s, axis=-1, keepdims=True)
        p = jnp.exp(s)
        p = p / jnp.sum(p, axis=-1, keepdims=True)
        oh = jnp.einsum('bqk,bkd->bqd', p, vh,
                        preferred_element_type=jnp.float32)       # (B, S, hd)
        attn2 = attn2 + jnp.dot(oh.reshape(B * S, hd), wo_ref[h],
                                preferred_element_type=jnp.float32)

    # TODO(synk): training-mode dropout inside the encoder layer (eval = identity).
    y2 = _layernorm(x2 + attn2, g1_ref[...], be1_ref[...])
    ff = jnp.maximum(
        jnp.dot(y2, w1_ref[...], preferred_element_type=jnp.float32) + b1_ref[...],
        0.0)
    ff = jnp.dot(ff, w2_ref[...], preferred_element_type=jnp.float32) + b2_ref[...]
    z2 = _layernorm(y2 + ff, g2_ref[...], be2_ref[...])
    o_ref[...] = z2.reshape(B, S, D)


def _decoder_kernel(x_ref, w1_ref, b1_ref, w2_ref, b2_ref, o_ref):
    """decoder = Linear(D, D) -> ReLU -> Linear(D, num_tokens)."""
    B, S, D = x_ref.shape
    V = o_ref.shape[-1]
    x2 = x_ref[...].reshape(B * S, D)
    h = jnp.maximum(
        jnp.dot(x2, w1_ref[...], preferred_element_type=jnp.float32) + b1_ref[...],
        0.0)
    y = jnp.dot(h, w2_ref[...], preferred_element_type=jnp.float32) + b2_ref[...]
    o_ref[...] = y.reshape(B, S, V)


# ----------------------------------------------------------------------------
# Wrappers (grid-less single-block pallas_calls; everything resident in VMEM)
# ----------------------------------------------------------------------------
_VMEM = pl.BlockSpec(memory_space=pltpu.MemorySpace.VMEM)
_SMEM = pl.BlockSpec(memory_space=pltpu.MemorySpace.SMEM)


def _vmem_call(kernel, out_shape, *args):
    return pl.pallas_call(
        kernel,
        out_shape=out_shape,
        in_specs=[_VMEM] * len(args),
        out_specs=_VMEM,
    )(*args)


def transformer_forward(kparams, src_ids, *, num_heads,
                        dropout_p=0.1, training=False, seed=0):
    """src_ids: (B, S) int32 token ids.  Returns (B, S, num_tokens) logits.
    NOTE: in training mode the caller must advance `seed` per call to get fresh
    dropout masks (matching PyTorch's stateful RNG)."""
    B, S = src_ids.shape
    V, D = kparams["embedding"].shape
    scale = math.sqrt(D)
    x_shape = jax.ShapeDtypeStruct((B, S, D), jnp.float32)

    if training and dropout_p > 0.0:
        kernel = functools.partial(
            _embed_pe_dropout_kernel, scale=scale,
            keep_threshold=int(round(dropout_p * (2 ** 32))),
            inv_keep=1.0 / (1.0 - dropout_p))
        x = pl.pallas_call(
            kernel,
            out_shape=x_shape,
            in_specs=[_SMEM, _VMEM, _VMEM, _VMEM],
            out_specs=_VMEM,
        )(jnp.array([seed], jnp.int32), src_ids,
          kparams["embedding"], kparams["pos_encoding"])
    else:
        x = _vmem_call(functools.partial(_embed_pe_kernel, scale=scale),
                       x_shape, src_ids, kparams["embedding"],
                       kparams["pos_encoding"])

    for lp in kparams["layers"]:
        x = _vmem_call(
            _encoder_layer_kernel, x_shape,
            x, lp["wq"], lp["bq"], lp["wk"], lp["bk"], lp["wv"], lp["bv"],
            lp["wo"], lp["bo"], lp["ln1_g"], lp["ln1_b"],
            lp["w1"], lp["b1"], lp["w2"], lp["b2"], lp["ln2_g"], lp["ln2_b"])

    return _vmem_call(
        _decoder_kernel, jax.ShapeDtypeStruct((B, S, V), jnp.float32),
        x, kparams["dec_w1"], kparams["dec_b1"],
        kparams["dec_w2"], kparams["dec_b2"])


# ----------------------------------------------------------------------------
# Pure-JAX reference (eval-mode PyTorch semantics), for correctness checking
# ----------------------------------------------------------------------------
def _ref_layernorm(x, g, b, eps=1e-5):
    mu = jnp.mean(x, axis=-1, keepdims=True)
    xc = x - mu
    var = jnp.mean(xc * xc, axis=-1, keepdims=True)
    return xc / jnp.sqrt(var + eps) * g + b


def reference_forward(params, src_ids, num_heads):
    P = lax.Precision.HIGHEST
    D = params["embedding"].shape[1]
    x = params["embedding"][src_ids] * math.sqrt(D)                 # (B, S, D)
    B, S, _ = x.shape
    x = x + params["pos_encoding"][:B][:, None, :]                  # dropout: eval identity
    H = num_heads
    hd = D // H
    for lp in params["layers"]:
        q = jnp.einsum('bsd,ed->bse', x, lp["wq"], precision=P) + lp["bq"]
        k = jnp.einsum('bsd,ed->bse', x, lp["wk"], precision=P) + lp["bk"]
        v = jnp.einsum('bsd,ed->bse', x, lp["wv"], precision=P) + lp["bv"]
        q = q.reshape(B, S, H, hd).transpose(0, 2, 1, 3)
        k = k.reshape(B, S, H, hd).transpose(0, 2, 1, 3)
        v = v.reshape(B, S, H, hd).transpose(0, 2, 1, 3)
        s = jnp.einsum('bhqd,bhkd->bhqk', q, k, precision=P) / math.sqrt(hd)
        a = jax.nn.softmax(s, axis=-1)
        o = jnp.einsum('bhqk,bhkd->bhqd', a, v, precision=P)
        o = o.transpose(0, 2, 1, 3).reshape(B, S, D)
        attn = jnp.einsum('bsd,ed->bse', o, lp["wo"], precision=P) + lp["bo"]
        x = _ref_layernorm(x + attn, lp["ln1_g"], lp["ln1_b"])
        ff = jnp.maximum(
            jnp.einsum('bsd,fd->bsf', x, lp["w1"], precision=P) + lp["b1"], 0.0)
        ff = jnp.einsum('bsf,df->bsd', ff, lp["w2"], precision=P) + lp["b2"]
        x = _ref_layernorm(x + ff, lp["ln2_g"], lp["ln2_b"])
    h = jnp.maximum(
        jnp.einsum('bsd,ed->bse', x, params["dec_w1"], precision=P) + params["dec_b1"],
        0.0)
    return jnp.einsum('bsd,ed->bse', h, params["dec_w2"], precision=P) + params["dec_b2"]


# ----------------------------------------------------------------------------
# Main
# ----------------------------------------------------------------------------
if __name__ == "__main__":
    num_tokens_ = 10
    d_model = 32
    num_heads = 2
    dim_feedforward = 64
    num_layers = 2
    max_len = 64          # stands in for the module's `batch_size` max_len
    dropout_p = 0.1
    B, S = 4, 8           # small shapes; pos_encoding is indexed by batch (module quirk)

    key = jax.random.PRNGKey(0)
    k_ids, k_params = jax.random.split(key)
    src_ids = jax.random.randint(k_ids, (B, S), 0, num_tokens_, dtype=jnp.int32)

    torch_style_params = init_params(k_params, num_tokens_, d_model, num_heads,
                                     dim_feedforward, num_layers, max_len)
    kernel_params = pack_params(torch_style_params, num_heads)

    # Eval-mode forward (all dropouts identity), matching module.eval().
    out = transformer_forward(kernel_params, src_ids, num_heads=num_heads,
                              dropout_p=dropout_p, training=False)
    out = jax.block_until_ready(out)

    ref = reference_forward(torch_style_params, src_ids, num_heads)
    assert out.shape == (B, S, num_tokens_)
    max_err = float(jnp.max(jnp.abs(out - ref)))
    assert jnp.allclose(out, ref, atol=2e-3, rtol=2e-3), f"max abs err {max_err}"

    print("KERNEL_OK")
</pallas_src>

<mosaic_0001>
module attributes {stable_mosaic.version = 11 : i64} {
  func.func @_embed_pe_kernel(%arg0: memref<4x8xi32, #tpu.memory_space<vmem>>, %arg1: memref<10x32xf32, #tpu.memory_space<vmem>>, %arg2: memref<64x32xf32, #tpu.memory_space<vmem>>, %arg3: memref<4x8x32xf32, #tpu.memory_space<vmem>>) attributes {dimension_semantics = [], scalar_prefetch = 0 : i64, scratch_operands = 0 : i64, tpu.core_type = #tpu.core_type<tc>} {
    %c0 = arith.constant 0 : index
    %c0_0 = arith.constant 0 : index
    %0 = vector.load %arg0[%c0, %c0_0] : memref<4x8xi32, #tpu.memory_space<vmem>>, vector<4x8xi32>
    %1 = tpu.iota {dimensions = array<i32: 2>} : vector<4x8x10xi32>
    %2 = vector.shape_cast %0 : vector<4x8xi32> to vector<4x8x1xi32>
    %3 = vector.broadcast %2 : vector<4x8x1xi32> to vector<4x8x10xi32>
    %4 = arith.cmpi eq, %3, %1 : vector<4x8x10xi32>
    %5 = arith.extui %4 : vector<4x8x10xi1> to vector<4x8x10xi32>
    %6 = arith.sitofp %5 : vector<4x8x10xi32> to vector<4x8x10xf32>
    %7 = vector.shape_cast %6 : vector<4x8x10xf32> to vector<32x10xf32>
    %c0_1 = arith.constant 0 : index
    %c0_2 = arith.constant 0 : index
    %8 = vector.load %arg1[%c0_1, %c0_2] : memref<10x32xf32, #tpu.memory_space<vmem>>, vector<10x32xf32>
    %cst = arith.constant dense<0.000000e+00> : vector<32x32xf32>
    %9 = tpu.matmul %7, %8, %cst {dimension_numbers = #tpu.dot_dimension_numbers<[1], [0], [0], [1], [0, 0, 1, 1], [], []>} : vector<32x10xf32>, vector<10x32xf32>, vector<32x32xf32> -> vector<32x32xf32>
    %10 = vector.shape_cast %9 : vector<32x32xf32> to vector<4x8x32xf32>
    %cst_3 = arith.constant 5.65685415 : f32
    %11 = vector.broadcast %cst_3 : f32 to vector<4x8x32xf32>
    %12 = arith.mulf %10, %11 : vector<4x8x32xf32>
    %c0_4 = arith.constant 0 : index
    %c0_5 = arith.constant 0 : index
    %13 = vector.load %arg2[%c0_4, %c0_5] : memref<64x32xf32, #tpu.memory_space<vmem>>, vector<4x32xf32>
    %14 = vector.shape_cast %13 : vector<4x32xf32> to vector<4x1x32xf32>
    %15 = vector.broadcast %14 : vector<4x1x32xf32> to vector<4x8x32xf32>
    %16 = arith.addf %12, %15 : vector<4x8x32xf32>
    %c0_6 = arith.constant 0 : index
    %c0_7 = arith.constant 0 : index
    %c0_8 = arith.constant 0 : index
    %17 = vector.load %arg3[%c0_6, %c0_7, %c0_8] : memref<4x8x32xf32, #tpu.memory_space<vmem>>, vector<4x8x32xf32>
    tpu.vector_store %arg3[%c0_6, %c0_7, %c0_8], %16 {strides = array<i32>} : memref<4x8x32xf32, #tpu.memory_space<vmem>>, vector<4x8x32xf32>,
    return
  }
}

</mosaic_0001>

<llo_original>
// kernel: tpu_custom_call.1
$region0: #{tpu_custom_call.1}
  #allocation0 [shape = 'u32[]', space=smem, size = 0x4, offset = 0x4, fixed_abs, tag = 'smem constant byte address 0x4 - core index']
  #allocation1 [shape = 'u32[72,128]{1,0:T(1,128)}', space=vmem, size = 0x9000, scoped, tag = 'internal scratch']
  %s0 = inlined_call_operand.vmem [shape: s32[4,8], index: 0, kind: input, shape index: {}]
  %s1 = inlined_call_operand.vmem [shape: f32[10,32], index: 1, kind: input, shape index: {}]
  %s2 = inlined_call_operand.vmem [shape: f32[64,32], index: 2, kind: input, shape index: {}]
  %s3 = inlined_call_operand.hbm [shape: f32[4,8,32], index: 3, kind: output, shape index: {}]
  %s4 = sld [smem:[#allocation0]]
  $region22: #{tpu_custom_call.1} parent=0
    _
  %s6 = ssub.s32 1, %s4
  %s7 = scalar_select 0, %s6, %s4
  $region1: #{tpu_custom_call.1} parent=0
    #allocation2 [shape = 'u8[16384]{0}', space=vmem, size = 0x4000, scoped, tag = 'output window, operand 0, single buffered']
    #allocation3 [shape = 's32[1]{0}', space=sflag, size = 0x4, scoped, tag = 'scoped memory for tpu_custom_call.1']
    %8 = vsyncpa [#allocation3], 0
    // Predicated region
    $region2: #{tpu_custom_call.1} parent=1 // pred_check
      _
    $region3: #{tpu_custom_call.1} parent=1 // pred_check_branch
      %10 = sbr.rel (0) target = $region5
    $region4: #{tpu_custom_call.1} parent=1 // pred_region
      _
    $region5: #{tpu_custom_call.1} parent=1 // pred_fallthru
      _
    // Predicated region
    $region6: #{tpu_custom_call.1} parent=1 // pred_check
      _
    $region7: #{tpu_custom_call.1} parent=1 // pred_check_branch
      %12 = sbr.rel (0) target = $region9
    $region8: #{tpu_custom_call.1} parent=1 // pred_region
      _
    $region9: #{tpu_custom_call.1} parent=1 // pred_fallthru
      _
    // Predicated region
    $region10: #{tpu_custom_call.1} parent=1 // pred_check
      _
    $region11: #{tpu_custom_call.1} parent=1 // pred_check_branch
      %14 = sbr.rel (0) target = $region13
    $region12: #{tpu_custom_call.1} parent=1 // pred_region
      _
    $region13: #{tpu_custom_call.1} parent=1 // pred_fallthru
      _
    %v15 = vld [vmem:[%s0] sm:$0xf]
    %v16 = vlaneseq
    %v17 = vand.u32 %v16, 127
    %v18 = vperm.slane %v15, 0
    %v19 = vlaneseq
    %v20 = vshrl.u32 %v19, 7
    %22 = vset.pattern.permute.xlu0 %v20
    %23 = vperm.xlu0 %22, %v18
    %v24 = vpop.permute.xlu0 %23
    %v25 = vperm.slane %v15, 1
    %v26 = vlaneseq
    %v27 = vshrl.u32 %v26, 7
    %29 = vset.pattern.permute.xlu0 %v27
    %30 = vperm.xlu0 %29, %v25
    %v31 = vpop.permute.xlu0 %30
    %v32 = vperm.slane %v15, 2
    %v33 = vlaneseq
    %v34 = vshrl.u32 %v33, 7
    %36 = vset.pattern.permute.xlu0 %v34
    %37 = vperm.xlu0 %36, %v32
    %v38 = vpop.permute.xlu0 %37
    %v39 = vperm.slane %v15, 3
    %v40 = vlaneseq
    %v41 = vshrl.u32 %v40, 7
    %43 = vset.pattern.permute.xlu0 %v41
    %44 = vperm.xlu0 %43, %v39
    %v45 = vpop.permute.xlu0 %44
    %vm46 = vcmp.eq.s32.totalorder %v24, %v17
    %vm47 = vcmp.eq.s32.totalorder %v31, %v17
    %vm48 = vcmp.eq.s32.totalorder %v38, %v17
    %vm49 = vcmp.eq.s32.totalorder %v45, %v17
    %v50 = vsel %vm46, 1, 0
    %v51 = vsel %vm47, 1, 0
    %v52 = vsel %vm48, 1, 0
    %v53 = vsel %vm49, 1, 0
    %v54 = vcvt.s32.f32 %v50
    %v55 = vcvt.s32.f32 %v51
    %v56 = vcvt.s32.f32 %v52
    %v57 = vcvt.s32.f32 %v53
    %v58 = vld [vmem:[%s1] sm:$0xff]
    %v59 = vld [vmem:[%s1 + $0x8] sm:$0x3]
    %vm60 = vcmask 80896
    %v62 = vsel %vm60, %v54, 0
    %v65 = vsel %vm60, %v55, 0
    %v68 = vsel %vm60, %v56, 0
    %v71 = vsel %vm60, %v57, 0
    %vm73 = vcmask 1041408
    %v75 = vsel %vm73, %v59, 0
    %77 = vmatpush.msra.mxu0 0.0
    %78 = vmatpush.msra.mxu0 0.0
    %79 = vmatpush.msra.mxu0 0.0
    %80 = vmatpush.msra.mxu0 0.0
    %81 = vmatpush.msra.mxu0 0.0
    %82 = vmatpush.msra.mxu0 0.0
    %83 = vmatpush.msra.mxu0 0.0
    %84 = vmatpush.msra.mxu0 0.0
    %85 = vmatpush.msra.mxu0 0.0
    %86 = vmatpush.msra.mxu0 0.0
    %87 = vmatpush.msra.mxu0 0.0
    %88 = vmatpush.msra.mxu0 0.0
    %89 = vmatpush.msra.mxu0 0.0
    %90 = vmatpush.msra.mxu0 0.0
    %91 = vmatpush.msra.mxu0 %v75
    %92 = vmatpush.msra.mxu0 %v58
    %93 = vmatmul.f32.gmra.mxu0 %v62
    %v94 = vpop.f32.mrf.mxu0
    %v95 = vadd.f32 0.0, %v94
    %96 = vmatmul.f32.gmra.mxu0 %v65
    %v97 = vpop.f32.mrf.mxu0
    %v98 = vadd.f32 0.0, %v97
    %99 = vmatmul.f32.gmra.mxu0 %v68
    %v100 = vpop.f32.mrf.mxu0
    %v101 = vadd.f32 0.0, %v100
    %102 = vmatmul.f32.gmra.mxu0 %v71
    %v103 = vpop.f32.mrf.mxu0
    %v104 = vadd.f32 0.0, %v103
    %105 = vdwg.mxu0
    %v106 = vmul.f32 %v95, 5.656854
    %v107 = vmul.f32 %v98, 5.656854
    %v108 = vmul.f32 %v101, 5.656854
    %v109 = vmul.f32 %v104, 5.656854
    %v110 = vld [vmem:[%s2] sm:$0xf]
    %v112 = vrot.slane %v110, 1
    %v113 = vrot.slane %v110, 2
    %v114 = vrot.slane %v110, 3
    %v115 = vperm.slane %v110, 0
    %v116 = vperm.slane %v112, 0
    %v117 = vperm.slane %v113, 0
    %v118 = vperm.slane %v114, 0
    %v123 = vadd.f32 %v106, %v115
    %v124 = vadd.f32 %v107, %v116
    %v125 = vadd.f32 %v108, %v117
    %v126 = vadd.f32 %v109, %v118
    %vm127 = vcmask 261120
    %128 = vst.msk [vmem:[#allocation2] sm:$0xff] %vm127, %v123
    %129 = vst.msk [vmem:[#allocation2 + $0x8] sm:$0xff] %vm127, %v124
    %130 = vst.msk [vmem:[#allocation2 + $0x10] sm:$0xff] %vm127, %v125
    %131 = vst.msk [vmem:[#allocation2 + $0x18] sm:$0xff] %vm127, %v126
    // Predicated region
    $region14: #{tpu_custom_call.1} parent=1 // pred_check
      _
    $region15: #{tpu_custom_call.1} parent=1 // pred_check_branch
      %133 = sbr.rel (0) target = $region17
    $region16: #{tpu_custom_call.1} parent=1 // pred_region
      %135 = vsyncadd [#allocation3], 0
      %s136 = sshll.u32 [#allocation2], 4
      %s137 = int_to_ptr.vmem [resolvable:$true] %s136
      %s138 = sshll.u32 %s3, 4
      %s139 = int_to_ptr.hbm [resolvable:$true] %s138
      %144 = dma.vmem_to_hbm [thread:$0]  %s137, 512, %s139, [#allocation3], 128, 128, 8
    $region17: #{tpu_custom_call.1} parent=1 // pred_fallthru
      _
    // Predicated region
    $region18: #{tpu_custom_call.1} parent=1 // pred_check
      _
    $region19: #{tpu_custom_call.1} parent=1 // pred_check_branch
      %146 = sbr.rel (0) target = $region21
    $region20: #{tpu_custom_call.1} parent=1 // pred_region
      %148 = dma.done [#allocation3], 512
    $region21: #{tpu_custom_call.1} parent=1 // pred_fallthru
      _
    %149 = vsyncpa [#allocation3], 1

</llo_original>
